<compile_context>
chip_gen: v7x
topology: tpu7x:2x2x1
jax: 0.10.0
libtpu: 0.0.40
codegen_flags: <defaults>
</compile_context>

<pallas_src>
import jax
import jax.numpy as jnp
from jax.experimental import pallas as pl
from jax.experimental.pallas import tpu as pltpu


# ----------------------------- kernels -------------------------------------------


def _deconv_fused_kernel(x_ref, w0_ref, w1_ref, b_ref, o_ref):
    """x_ref: (rows*W, Cin); w*_ref: (Cin, tn); b_ref: (1, tn); o_ref: (rows, 2, W, tn)."""
    rows, _, w_dim, tn = o_ref.shape
    x = x_ref[...].astype(w0_ref.dtype)          # optional bf16 cast happens in-VMEM
    y0 = jnp.dot(x, w0_ref[...], preferred_element_type=jnp.float32) + b_ref[...]
    y1 = jnp.dot(x, w1_ref[...], preferred_element_type=jnp.float32) + b_ref[...]
    # (rows*W, tn) -> (rows, W, tn): pure sublane regrouping when W % 8 == 0.
    o_ref[:, 0, :, :] = y0.reshape(rows, w_dim, tn).astype(o_ref.dtype)
    o_ref[:, 1, :, :] = y1.reshape(rows, w_dim, tn).astype(o_ref.dtype)


def _deconv_flat_kernel(x_ref, w_ref, b_ref, o_ref):
    """Fallback (W % 8 != 0): plain (tm, Cin) x (Cin, 4*Cout) matmul, layout fixed in XLA."""
    x = x_ref[...].astype(w_ref.dtype)
    acc = jnp.dot(x, w_ref[...], preferred_element_type=jnp.float32)
    o_ref[...] = (acc + b_ref[...]).astype(o_ref.dtype)


# ----------------------------- tiling helpers -------------------------------------


def _round_up(x, m):
    return ((x + m - 1) // m) * m


def _largest_divisor_leq(n, cap):
    cap = max(1, min(n, int(cap)))
    for d in range(cap, 0, -1):
        if n % d == 0:
            return d
    return 1


def _vmem_budget_bytes():
    """Generation-aware VMEM planning budget + scoped limit (v5e/v6e: 128 MiB, v7x: 64 MiB)."""
    try:
        cap = int(getattr(pltpu.get_tpu_info(), "vmem_capacity_bytes", 0))
    except Exception:
        cap = 0
    if cap <= 0:
        cap = 64 * 1024 * 1024                           # conservative (v7x per-TC)
    limit = min(int(cap * 0.85), cap - 4 * 1024 * 1024)  # ~109 MiB v5e/v6e, ~54 MiB v7x
    budget = limit - 6 * 1024 * 1024                     # headroom for compiler scratch
    return budget, limit


def _choose_fused_tiles(NH, W, Cin, Cout, x_bytes, w_bytes, out_bytes, budget):
    two_cout = 2 * Cout

    def resident_bytes(tn):
        # two (Cin, tn) weight slabs + (1, tn) f32 bias, double-buffered by the pipeline
        return 2 * (2 * Cin * tn * w_bytes + tn * 4)

    # Tile 2*Cout only when the resident weight would eat the budget (keeps tm large
    # on v7x instead of bottoming out at tiny M tiles).
    tn = two_cout
    if resident_bytes(tn) > budget // 2 and two_cout % 128 == 0:
        cands = [d for d in range(128, two_cout, 128)
                 if two_cout % d == 0 and resident_bytes(d) <= budget // 2]
        if cands:
            tn = max(cands)

    per_row = (2 * W * Cin * x_bytes            # x tile (double-buffered)
               + 2 * 2 * W * tn * out_bytes     # out tile (double-buffered)
               + 2 * 2 * W * tn * 4)            # f32 matmul / bias intermediates
    avail = max(budget - resident_bytes(tn), per_row)
    rows_cap = max(1, avail // per_row)
    rows_cap = min(rows_cap, max(1, 4096 // W))  # a few thousand pixels saturate HBM BW
    rows = _largest_divisor_leq(NH, rows_cap)    # divisor of N*H -> no padding pass
    return rows, tn


# ----------------------------- entry points ---------------------------------------


def deconv2d_nhwc(x, weight, bias, *, compute_dtype=None, use_core_parallel=False):
    """ConvTranspose2d(kernel=2, stride=2, padding=0) on NHWC input -> NHWC output.

    x: (N, H, W, Cin);  weight: (Cin, Cout, 2, 2) [PyTorch layout];  bias: (Cout,).
    Returns (N, 2H, 2W, Cout) in x.dtype.  Preferred entry point (no layout transposes).
    """
    N, H, W, Cin = x.shape
    Cin_w, Cout, kh, kw = weight.shape
    assert Cin == Cin_w and kh == 2 and kw == 2, (x.shape, weight.shape)

    out_dtype = x.dtype
    w_dtype = jnp.dtype(compute_dtype) if compute_dtype is not None else jnp.dtype(x.dtype)
    budget, vmem_limit = _vmem_budget_bytes()

    x_bytes = jnp.dtype(x.dtype).itemsize
    w_bytes = jnp.dtype(w_dtype).itemsize
    o_bytes = jnp.dtype(out_dtype).itemsize

    if W % 8 != 0:
        # Ragged W: in-kernel regrouping is no longer a layout no-op -> flat fallback.
        return _deconv2d_nhwc_flat(x, weight, bias, w_dtype, budget, vmem_limit)

    # Weight slabs ordered (b, co) with co fastest; one slab per output-row offset a.
    w_abco = jnp.transpose(weight, (2, 0, 3, 1)).astype(w_dtype)   # (2, Cin, 2, Cout)
    w0 = w_abco[0].reshape(Cin, 2 * Cout)
    w1 = w_abco[1].reshape(Cin, 2 * Cout)
    b_flat = jnp.tile(bias.astype(jnp.float32), 2).reshape(1, 2 * Cout)

    NH = N * H
    rows, tn = _choose_fused_tiles(NH, W, Cin, Cout, x_bytes, w_bytes, o_bytes, budget)
    tm = rows * W
    grid = (NH // rows, (2 * Cout) // tn)

    sem = ("parallel", "arbitrary")
    if use_core_parallel:
        sem = (pltpu.CORE_PARALLEL, pltpu.ARBITRARY)   # shard M across TCs on v7x

    x_flat = x.reshape(N * H * W, Cin)                 # pure view: no cast, no pad

    out = pl.pallas_call(
        _deconv_fused_kernel,
        out_shape=jax.ShapeDtypeStruct((NH, 2, W, 2 * Cout), out_dtype),
        grid=grid,
        in_specs=[
            pl.BlockSpec((tm, Cin), lambda i, j: (i, 0)),
            pl.BlockSpec((Cin, tn), lambda i, j: (0, j)),   # resident across M axis
            pl.BlockSpec((Cin, tn), lambda i, j: (0, j)),
            pl.BlockSpec((1, tn), lambda i, j: (0, j)),
        ],
        out_specs=pl.BlockSpec((rows, 2, W, tn), lambda i, j: (i, 0, 0, j)),
        compiler_params=pltpu.CompilerParams(
            dimension_semantics=sem,
            vmem_limit_bytes=vmem_limit,
        ),
    )(x_flat, w0, w1, b_flat)

    # (NH, 2, W, 2, Cout) row-major == (N, 2H, 2W, Cout): pure reshape, no transpose.
    return out.reshape(N, 2 * H, 2 * W, Cout)


def _deconv2d_nhwc_flat(x, weight, bias, w_dtype, budget, vmem_limit):
    """Fallback for W % 8 != 0: (M, Cin) x (Cin, 4*Cout) matmul + XLA layout pass."""
    N, H, W, Cin = x.shape
    _, Cout, _, _ = weight.shape
    out_dtype = x.dtype
    M = N * H * W

    w_flat = jnp.transpose(weight, (0, 2, 3, 1)).reshape(Cin, 4 * Cout).astype(w_dtype)
    b_flat = jnp.tile(bias.astype(jnp.float32), 4).reshape(1, 4 * Cout)

    x_bytes = jnp.dtype(x.dtype).itemsize
    w_bytes = jnp.dtype(w_dtype).itemsize
    o_bytes = jnp.dtype(out_dtype).itemsize

    fixed = 2 * (Cin * 4 * Cout * w_bytes + 4 * Cout * 4)
    per_row = 2 * (Cin * x_bytes + 4 * Cout * o_bytes) + 2 * 4 * Cout * 4
    tm = max(8, min(4096, (max(budget - fixed, per_row) // per_row) // 8 * 8))
    tm = min(tm, _round_up(M, 8))
    Mp = _round_up(M, tm)

    x_flat = x.reshape(M, Cin)
    if Mp != M:
        x_flat = jnp.pad(x_flat, ((0, Mp - M), (0, 0)))

    out_flat = pl.pallas_call(
        _deconv_flat_kernel,
        out_shape=jax.ShapeDtypeStruct((Mp, 4 * Cout), out_dtype),
        grid=(Mp // tm,),
        in_specs=[
            pl.BlockSpec((tm, Cin), lambda i: (i, 0)),
            pl.BlockSpec((Cin, 4 * Cout), lambda i: (0, 0)),
            pl.BlockSpec((1, 4 * Cout), lambda i: (0, 0)),
        ],
        out_specs=pl.BlockSpec((tm, 4 * Cout), lambda i: (i, 0)),
        compiler_params=pltpu.CompilerParams(
            dimension_semantics=("parallel",),
            vmem_limit_bytes=vmem_limit,
        ),
    )(x_flat, w_flat, b_flat)

    if Mp != M:
        out_flat = out_flat[:M]
    y = out_flat.reshape(N, H, W, 2, 2, Cout)
    y = jnp.transpose(y, (0, 1, 3, 2, 4, 5)).reshape(N, 2 * H, 2 * W, Cout)
    return y


def deconv2d(x, weight, bias, *, compute_dtype=None, use_core_parallel=False):
    """PyTorch-layout forward (NCHW in -> NCHW out), matching nn.ConvTranspose2d(k=2, s=2).

    Prefer deconv2d_nhwc end-to-end: the two transposes here are full HBM passes that
    the NHWC entry point avoids.
    """
    x_nhwc = jnp.transpose(x, (0, 2, 3, 1))
    y = deconv2d_nhwc(x_nhwc, weight, bias, compute_dtype=compute_dtype,
                      use_core_parallel=use_core_parallel)
    return jnp.transpose(y, (0, 3, 1, 2))


# ----------------------------- reference & init -----------------------------------


def _reference_deconv2d(x, weight, bias):
    # y[n,co,2i+a,2j+b] = sum_ci x[n,ci,i,j] * W[ci,co,a,b] + bias[co]
    N, Cin, H, W = x.shape
    _, Cout, _, _ = weight.shape
    y = jnp.einsum("ncij,cdab->ndiajb", x, weight)
    return y.reshape(N, Cout, 2 * H, 2 * W) + bias[None, :, None, None]


def init_params(key, c_in, c_out, dtype=jnp.float32):
    # PyTorch-style init: xavier_uniform_ on weight, default uniform bias.
    kw_key, kb_key = jax.random.split(key)
    fan_in = c_out * 2 * 2
    fan_out = c_in * 2 * 2
    bound_w = (6.0 / (fan_in + fan_out)) ** 0.5
    weight = jax.random.uniform(kw_key, (c_in, c_out, 2, 2), dtype,
                                minval=-bound_w, maxval=bound_w)
    bound_b = 1.0 / (fan_in ** 0.5)
    bias = jax.random.uniform(kb_key, (c_out,), dtype,
                              minval=-bound_b, maxval=bound_b)
    return weight, bias


if __name__ == "__main__":
    key = jax.random.PRNGKey(0)
    k_x, k_p, k_x2, k_p2 = jax.random.split(key, 4)

    N, C_IN, C_OUT, H, W = 2, 4, 8, 16, 16
    x = jax.random.normal(k_x, (N, C_IN, H, W), jnp.float32)
    weight, bias = init_params(k_p, C_IN, C_OUT)
    y_ref = _reference_deconv2d(x, weight, bias)

    # NCHW entry (exact PyTorch semantics), f32 compute.
    y = jax.block_until_ready(deconv2d(x, weight, bias))
    assert y.shape == (N, C_OUT, 2 * H, 2 * W), y.shape
    assert jnp.allclose(y, y_ref, atol=1e-4, rtol=1e-4)

    # Preferred NHWC entry: zero layout transposes around the kernel.
    x_nhwc = jnp.transpose(x, (0, 2, 3, 1))
    y_nhwc = jax.block_until_ready(deconv2d_nhwc(x_nhwc, weight, bias))
    assert y_nhwc.shape == (N, 2 * H, 2 * W, C_OUT), y_nhwc.shape
    assert jnp.allclose(jnp.transpose(y_nhwc, (0, 3, 1, 2)), y_ref, atol=1e-4, rtol=1e-4)

    # bf16 compute path: x stays f32 in HBM, the cast happens in-VMEM inside the kernel.
    y_bf16 = jax.block_until_ready(deconv2d(x, weight, bias, compute_dtype=jnp.bfloat16))
    assert jnp.allclose(y_bf16, y_ref, atol=5e-2, rtol=5e-2)

    # Ragged-W fallback path (W % 8 != 0) still runs and matches.
    x2 = jax.random.normal(k_x2, (1, 3, 4, 5), jnp.float32)
    w2, b2 = init_params(k_p2, 3, 5)
    y2 = jax.block_until_ready(deconv2d(x2, w2, b2))
    assert jnp.allclose(y2, _reference_deconv2d(x2, w2, b2), atol=1e-4, rtol=1e-4)

    print("KERNEL_OK")
</pallas_src>

<mosaic_0001>
module attributes {stable_mosaic.version = 11 : i64} {
  func.func @_deconv_fused_kernel(%arg0: i32, %arg1: i32, %arg2: memref<512x4xf32, #tpu.memory_space<vmem>>, %arg3: memref<4x16xf32, #tpu.memory_space<vmem>>, %arg4: memref<4x16xf32, #tpu.memory_space<vmem>>, %arg5: memref<1x16xf32, #tpu.memory_space<vmem>>, %arg6: memref<32x2x16x16xf32, #tpu.memory_space<vmem>>) attributes {dimension_semantics = [#tpu.dimension_semantics<parallel>, #tpu.dimension_semantics<arbitrary>], iteration_bounds = array<i64: 1, 1>, scalar_prefetch = 0 : i64, scratch_operands = 0 : i64, tpu.core_type = #tpu.core_type<tc>, window_params = [{transform_indices = @transform_0, window_bounds = array<i64: 512, 4>}, {transform_indices = @transform_1, window_bounds = array<i64: 4, 16>}, {transform_indices = @transform_2, window_bounds = array<i64: 4, 16>}, {transform_indices = @transform_3, window_bounds = array<i64: 1, 16>}, {transform_indices = @transform_4, window_bounds = array<i64: 32, 2, 16, 16>}]} {
    %c0 = arith.constant 0 : index
    %c0_0 = arith.constant 0 : index
    %0 = vector.load %arg2[%c0, %c0_0] : memref<512x4xf32, #tpu.memory_space<vmem>>, vector<512x4xf32>
    %c0_1 = arith.constant 0 : index
    %c0_2 = arith.constant 0 : index
    %1 = vector.load %arg3[%c0_1, %c0_2] : memref<4x16xf32, #tpu.memory_space<vmem>>, vector<4x16xf32>
    %cst = arith.constant dense<0.000000e+00> : vector<512x16xf32>
    %2 = tpu.matmul %0, %1, %cst {dimension_numbers = #tpu.dot_dimension_numbers<[1], [0], [0], [1], [0, 0, 1, 1], [], []>} : vector<512x4xf32>, vector<4x16xf32>, vector<512x16xf32> -> vector<512x16xf32>
    %c0_3 = arith.constant 0 : index
    %c0_4 = arith.constant 0 : index
    %3 = vector.load %arg5[%c0_3, %c0_4] : memref<1x16xf32, #tpu.memory_space<vmem>>, vector<1x16xf32>
    %4 = vector.broadcast %3 : vector<1x16xf32> to vector<512x16xf32>
    %5 = arith.addf %2, %4 : vector<512x16xf32>
    %c0_5 = arith.constant 0 : index
    %c0_6 = arith.constant 0 : index
    %6 = vector.load %arg4[%c0_5, %c0_6] : memref<4x16xf32, #tpu.memory_space<vmem>>, vector<4x16xf32>
    %cst_7 = arith.constant dense<0.000000e+00> : vector<512x16xf32>
    %7 = tpu.matmul %0, %6, %cst_7 {dimension_numbers = #tpu.dot_dimension_numbers<[1], [0], [0], [1], [0, 0, 1, 1], [], []>} : vector<512x4xf32>, vector<4x16xf32>, vector<512x16xf32> -> vector<512x16xf32>
    %c0_8 = arith.constant 0 : index
    %c0_9 = arith.constant 0 : index
    %8 = vector.load %arg5[%c0_8, %c0_9] : memref<1x16xf32, #tpu.memory_space<vmem>>, vector<1x16xf32>
    %9 = vector.broadcast %8 : vector<1x16xf32> to vector<512x16xf32>
    %10 = arith.addf %7, %9 : vector<512x16xf32>
    %11 = vector.shape_cast %5 : vector<512x16xf32> to vector<32x16x16xf32>
    %c0_10 = arith.constant 0 : index
    %c0_11 = arith.constant 0 : index
    %c0_12 = arith.constant 0 : index
    %c0_13 = arith.constant 0 : index
    %12 = vector.load %arg6[%c0_10, %c0_11, %c0_12, %c0_13] : memref<32x2x16x16xf32, #tpu.memory_space<vmem>>, vector<32x1x16x16xf32>
    %13 = vector.shape_cast %12 : vector<32x1x16x16xf32> to vector<32x16x16xf32>
    %14 = vector.shape_cast %11 : vector<32x16x16xf32> to vector<32x1x16x16xf32>
    tpu.vector_store %arg6[%c0_10, %c0_11, %c0_12, %c0_13], %14 {strides = array<i32>} : memref<32x2x16x16xf32, #tpu.memory_space<vmem>>, vector<32x1x16x16xf32>,
    %15 = vector.shape_cast %10 : vector<512x16xf32> to vector<32x16x16xf32>
    %c0_14 = arith.constant 0 : index
    %c1 = arith.constant 1 : index
    %c0_15 = arith.constant 0 : index
    %c0_16 = arith.constant 0 : index
    %16 = vector.load %arg6[%c0_14, %c1, %c0_15, %c0_16] : memref<32x2x16x16xf32, #tpu.memory_space<vmem>>, vector<32x1x16x16xf32>
    %17 = vector.shape_cast %16 : vector<32x1x16x16xf32> to vector<32x16x16xf32>
    %18 = vector.shape_cast %15 : vector<32x16x16xf32> to vector<32x1x16x16xf32>
    tpu.vector_store %arg6[%c0_14, %c1, %c0_15, %c0_16], %18 {strides = array<i32>} : memref<32x2x16x16xf32, #tpu.memory_space<vmem>>, vector<32x1x16x16xf32>,
    return
  }
  func.func @transform_0(%arg0: i32, %arg1: i32) -> (i32, i32) {
    %c0_i32 = arith.constant 0 : i32
    %c0_i32_0 = arith.constant 0 : i32
    return %arg0, %c0_i32 : i32, i32
  }
  func.func @transform_1(%arg0: i32, %arg1: i32) -> (i32, i32) {
    %c0_i32 = arith.constant 0 : i32
    %c0_i32_0 = arith.constant 0 : i32
    return %c0_i32, %arg1 : i32, i32
  }
  func.func @transform_2(%arg0: i32, %arg1: i32) -> (i32, i32) {
    %c0_i32 = arith.constant 0 : i32
    %c0_i32_0 = arith.constant 0 : i32
    return %c0_i32, %arg1 : i32, i32
  }
  func.func @transform_3(%arg0: i32, %arg1: i32) -> (i32, i32) {
    %c0_i32 = arith.constant 0 : i32
    %c0_i32_0 = arith.constant 0 : i32
    return %c0_i32, %arg1 : i32, i32
  }
  func.func @transform_4(%arg0: i32, %arg1: i32) -> (i32, i32, i32, i32) {
    %c0_i32 = arith.constant 0 : i32
    %c0_i32_0 = arith.constant 0 : i32
    %c0_i32_1 = arith.constant 0 : i32
    return %arg0, %c0_i32, %c0_i32_0, %arg1 : i32, i32, i32, i32
  }
}

</mosaic_0001>

<llo_original>
// kernel: tpu_custom_call.1
$region0: #{tpu_custom_call.1}
  #allocation0 [shape = 'u32[]', space=smem, size = 0x4, offset = 0x4, fixed_abs, tag = 'smem constant byte address 0x4 - core index']
  #allocation1 [shape = 'u32[144,128]{1,0:T(1,128)}', space=vmem, size = 0x12000, scoped, tag = 'internal scratch']
  %s0 = inlined_call_operand.vmem [shape: f32[512,4], index: 0, kind: input, shape index: {}]
  %s1 = inlined_call_operand.vmem [shape: f32[4,16], index: 1, kind: input, shape index: {}]
  %s2 = inlined_call_operand.vmem [shape: f32[4,16], index: 2, kind: input, shape index: {}]
  %s3 = inlined_call_operand.vmem [shape: f32[1,16], index: 3, kind: input, shape index: {}]
  %s4 = inlined_call_operand.vmem [shape: f32[32,2,16,16], index: 4, kind: output, shape index: {}]
  %s5 = sld [smem:[#allocation0]]
  $region26: #{tpu_custom_call.1} parent=0
    _
  %s7 = ssub.s32 1, %s5
  %s8 = scalar_select 0, %s7, %s5
  // Predicated region
  $region2: #{tpu_custom_call.1} parent=0 // pred_check
    _
  $region3: #{tpu_custom_call.1} parent=0 // pred_check_branch
    %10 = sbr.rel (0) target = $region5
  $region4: #{tpu_custom_call.1} parent=0 // pred_region
    _
  $region5: #{tpu_custom_call.1} parent=0 // pred_fallthru
    _
  // Predicated region
  $region6: #{tpu_custom_call.1} parent=0 // pred_check
    _
  $region7: #{tpu_custom_call.1} parent=0 // pred_check_branch
    %12 = sbr.rel (0) target = $region9
  $region8: #{tpu_custom_call.1} parent=0 // pred_region
    _
  $region9: #{tpu_custom_call.1} parent=0 // pred_fallthru
    _
  // Predicated region
  $region10: #{tpu_custom_call.1} parent=0 // pred_check
    _
  $region11: #{tpu_custom_call.1} parent=0 // pred_check_branch
    %14 = sbr.rel (0) target = $region13
  $region12: #{tpu_custom_call.1} parent=0 // pred_region
    _
  $region13: #{tpu_custom_call.1} parent=0 // pred_fallthru
    _
  // Predicated region
  $region14: #{tpu_custom_call.1} parent=0 // pred_check
    _
  $region15: #{tpu_custom_call.1} parent=0 // pred_check_branch
    %16 = sbr.rel (0) target = $region17
  $region16: #{tpu_custom_call.1} parent=0 // pred_region
    _
  $region17: #{tpu_custom_call.1} parent=0 // pred_fallthru
    _
  %v17 = vld [vmem:[%s0] sm:$0xff]
  %v18 = vld [vmem:[%s0 + $0x8] sm:$0xff]
  %v19 = vld [vmem:[%s0 + $0x10] sm:$0xff]
  %v20 = vld [vmem:[%s0 + $0x18] sm:$0xff]
  %v21 = vld [vmem:[%s0 + $0x20] sm:$0xff]
  %v22 = vld [vmem:[%s0 + $0x28] sm:$0xff]
  %v23 = vld [vmem:[%s0 + $0x30] sm:$0xff]
  %v24 = vld [vmem:[%s0 + $0x38] sm:$0xff]
  %v25 = vld [vmem:[%s0 + $0x40] sm:$0xff]
  %v26 = vld [vmem:[%s0 + $0x48] sm:$0xff]
  %v27 = vld [vmem:[%s0 + $0x50] sm:$0xff]
  %v28 = vld [vmem:[%s0 + $0x58] sm:$0xff]
  %v29 = vld [vmem:[%s0 + $0x60] sm:$0xff]
  %v30 = vld [vmem:[%s0 + $0x68] sm:$0xff]
  %v31 = vld [vmem:[%s0 + $0x70] sm:$0xff]
  %v32 = vld [vmem:[%s0 + $0x78] sm:$0xff]
  %v33 = vld [vmem:[%s0 + $0x80] sm:$0xff]
  %v34 = vld [vmem:[%s0 + $0x88] sm:$0xff]
  %v35 = vld [vmem:[%s0 + $0x90] sm:$0xff]
  %v36 = vld [vmem:[%s0 + $0x98] sm:$0xff]
  %v37 = vld [vmem:[%s0 + $0xa0] sm:$0xff]
  %v38 = vld [vmem:[%s0 + $0xa8] sm:$0xff]
  %v39 = vld [vmem:[%s0 + $0xb0] sm:$0xff]
  %v40 = vld [vmem:[%s0 + $0xb8] sm:$0xff]
  %v41 = vld [vmem:[%s0 + $0xc0] sm:$0xff]
  %v42 = vld [vmem:[%s0 + $0xc8] sm:$0xff]
  %v43 = vld [vmem:[%s0 + $0xd0] sm:$0xff]
  %v44 = vld [vmem:[%s0 + $0xd8] sm:$0xff]
  %v45 = vld [vmem:[%s0 + $0xe0] sm:$0xff]
  %v46 = vld [vmem:[%s0 + $0xe8] sm:$0xff]
  %v47 = vld [vmem:[%s0 + $0xf0] sm:$0xff]
  %v48 = vld [vmem:[%s0 + $0xf8] sm:$0xff]
  %v49 = vld [vmem:[%s0 + $0x100] sm:$0xff]
  %v50 = vld [vmem:[%s0 + $0x108] sm:$0xff]
  %v51 = vld [vmem:[%s0 + $0x110] sm:$0xff]
  %v52 = vld [vmem:[%s0 + $0x118] sm:$0xff]
  %v53 = vld [vmem:[%s0 + $0x120] sm:$0xff]
  %v54 = vld [vmem:[%s0 + $0x128] sm:$0xff]
  %v55 = vld [vmem:[%s0 + $0x130] sm:$0xff]
  %v56 = vld [vmem:[%s0 + $0x138] sm:$0xff]
  %v57 = vld [vmem:[%s0 + $0x140] sm:$0xff]
  %v58 = vld [vmem:[%s0 + $0x148] sm:$0xff]
  %v59 = vld [vmem:[%s0 + $0x150] sm:$0xff]
  %v60 = vld [vmem:[%s0 + $0x158] sm:$0xff]
  %v61 = vld [vmem:[%s0 + $0x160] sm:$0xff]
  %v62 = vld [vmem:[%s0 + $0x168] sm:$0xff]
  %v63 = vld [vmem:[%s0 + $0x170] sm:$0xff]
  %v64 = vld [vmem:[%s0 + $0x178] sm:$0xff]
  %v65 = vld [vmem:[%s0 + $0x180] sm:$0xff]
  %v66 = vld [vmem:[%s0 + $0x188] sm:$0xff]
  %v67 = vld [vmem:[%s0 + $0x190] sm:$0xff]
  %v68 = vld [vmem:[%s0 + $0x198] sm:$0xff]
  %v69 = vld [vmem:[%s0 + $0x1a0] sm:$0xff]
  %v70 = vld [vmem:[%s0 + $0x1a8] sm:$0xff]
  %v71 = vld [vmem:[%s0 + $0x1b0] sm:$0xff]
  %v72 = vld [vmem:[%s0 + $0x1b8] sm:$0xff]
  %v73 = vld [vmem:[%s0 + $0x1c0] sm:$0xff]
  %v74 = vld [vmem:[%s0 + $0x1c8] sm:$0xff]
  %v75 = vld [vmem:[%s0 + $0x1d0] sm:$0xff]
  %v76 = vld [vmem:[%s0 + $0x1d8] sm:$0xff]
  %v77 = vld [vmem:[%s0 + $0x1e0] sm:$0xff]
  %v78 = vld [vmem:[%s0 + $0x1e8] sm:$0xff]
  %v79 = vld [vmem:[%s0 + $0x1f0] sm:$0xff]
  %v80 = vld [vmem:[%s0 + $0x1f8] sm:$0xff]
  %v81 = vld [vmem:[%s1] sm:$0xf]
  %v82 = vld [vmem:[%s3] sm:$0x1]
  %v84 = vlaneseq
  %v85 = vshrl.u32 %v84, 7
  %v86 = vsub.s32 0, %v85
  %v87 = vrot.slane %v82, %v86
  %vm89 = vcmask 31744
  %v91 = vsel %vm89, %v17, 0
  %v94 = vsel %vm89, %v18, 0
  %v97 = vsel %vm89, %v19, 0
  %v100 = vsel %vm89, %v20, 0
  %v103 = vsel %vm89, %v21, 0
  %v106 = vsel %vm89, %v22, 0
  %v109 = vsel %vm89, %v23, 0
  %v112 = vsel %vm89, %v24, 0
  %v115 = vsel %vm89, %v25, 0
  %v118 = vsel %vm89, %v26, 0
  %v121 = vsel %vm89, %v27, 0
  %v124 = vsel %vm89, %v28, 0
  %v127 = vsel %vm89, %v29, 0
  %v130 = vsel %vm89, %v30, 0
  %v133 = vsel %vm89, %v31, 0
  %v136 = vsel %vm89, %v32, 0
  %v139 = vsel %vm89, %v33, 0
  %v142 = vsel %vm89, %v34, 0
  %v145 = vsel %vm89, %v35, 0
  %v148 = vsel %vm89, %v36, 0
  %v151 = vsel %vm89, %v37, 0
  %v154 = vsel %vm89, %v38, 0
  %v157 = vsel %vm89, %v39, 0
  %v160 = vsel %vm89, %v40, 0
  %v163 = vsel %vm89, %v41, 0
  %v166 = vsel %vm89, %v42, 0
  %v169 = vsel %vm89, %v43, 0
  %v172 = vsel %vm89, %v44, 0
  %v175 = vsel %vm89, %v45, 0
  %v178 = vsel %vm89, %v46, 0
  %v181 = vsel %vm89, %v47, 0
  %v184 = vsel %vm89, %v48, 0
  %v187 = vsel %vm89, %v49, 0
  %v190 = vsel %vm89, %v50, 0
  %v193 = vsel %vm89, %v51, 0
  %v196 = vsel %vm89, %v52, 0
  %v199 = vsel %vm89, %v53, 0
  %v202 = vsel %vm89, %v54, 0
  %v205 = vsel %vm89, %v55, 0
  %v208 = vsel %vm89, %v56, 0
  %v211 = vsel %vm89, %v57, 0
  %v214 = vsel %vm89, %v58, 0
  %v217 = vsel %vm89, %v59, 0
  %v220 = vsel %vm89, %v60, 0
  %v223 = vsel %vm89, %v61, 0
  %v226 = vsel %vm89, %v62, 0
  %v229 = vsel %vm89, %v63, 0
  %v232 = vsel %vm89, %v64, 0
  %v235 = vsel %vm89, %v65, 0
  %v238 = vsel %vm89, %v66, 0
  %v241 = vsel %vm89, %v67, 0
  %v244 = vsel %vm89, %v68, 0
  %v247 = vsel %vm89, %v69, 0
  %v250 = vsel %vm89, %v70, 0
  %v253 = vsel %vm89, %v71, 0
  %v256 = vsel %vm89, %v72, 0
  %v259 = vsel %vm89, %v73, 0
  %v262 = vsel %vm89, %v74, 0
  %v265 = vsel %vm89, %v75, 0
  %v268 = vsel %vm89, %v76, 0
  %v271 = vsel %vm89, %v77, 0
  %v274 = vsel %vm89, %v78, 0
  %v277 = vsel %vm89, %v79, 0
  %v280 = vsel %vm89, %v80, 0
  %vm282 = vcmask 1043456
  %v284 = vsel %vm282, %v81, 0
  %286 = vmatprep.subr.mxu0 0.0
  %287 = vmatpush1.msra.mxu0 %v284
  %288 = vmatprep.subr.mxu0 0.0
  %289 = vmatpush1.msra.mxu0 0.0
  %290 = vmatprep.subr.mxu0 0.0
  %291 = vmatpush1.msra.mxu0 0.0
  %292 = vmatprep.subr.mxu0 0.0
  %293 = vmatpush1.msra.mxu0 0.0
  %294 = vmatprep.subr.mxu0 0.0
  %295 = vmatpush1.msra.mxu0 0.0
  %296 = vmatprep.subr.mxu0 0.0
  %297 = vmatpush1.msra.mxu0 0.0
  %298 = vmatprep.subr.mxu0 0.0
  %299 = vmatpush1.msra.mxu0 0.0
  %300 = vmatprep.subr.mxu0 0.0
  %301 = vmatpush1.msra.mxu0 0.0
  %302 = vmatprep.subr.mxu0 0.0
  %303 = vmatpush1.msra.mxu0 0.0
  %304 = vmatprep.subr.mxu0 0.0
  %305 = vmatpush1.msra.mxu0 0.0
  %306 = vmatprep.subr.mxu0 0.0
  %307 = vmatpush1.msra.mxu0 0.0
  %308 = vmatprep.subr.mxu0 0.0
  %309 = vmatpush1.msra.mxu0 0.0
  %310 = vmatprep.subr.mxu0 0.0
  %311 = vmatpush1.msra.mxu0 0.0
  %312 = vmatprep.subr.mxu0 0.0
  %313 = vmatpush1.msra.mxu0 0.0
  %314 = vmatprep.subr.mxu0 0.0
  %315 = vmatpush1.msra.mxu0 0.0
  %316 = vmatprep.subr.mxu0 0.0
  %317 = vmatpush1.msra.mxu0 0.0
  %318 = vmatprep.subr.mxu0 0.0
  %319 = vmatpush1.msra.mxu0 0.0
  %320 = vmatprep.subr.mxu0 0.0
  %321 = vmatpush1.msra.mxu0 0.0
  %322 = vmatprep.subr.mxu0 0.0
  %323 = vmatpush1.msra.mxu0 0.0
  %324 = vmatprep.subr.mxu0 0.0
  %325 = vmatpush1.msra.mxu0 0.0
  %326 = vmatprep.subr.mxu0 0.0
  %327 = vmatpush1.msra.mxu0 0.0
  %328 = vmatprep.subr.mxu0 0.0
  %329 = vmatpush1.msra.mxu0 0.0
  %330 = vmatprep.subr.mxu0 0.0
  %331 = vmatpush1.msra.mxu0 0.0
  %332 = vmatprep.subr.mxu0 0.0
  %333 = vmatpush1.msra.mxu0 0.0
  %334 = vmatprep.subr.mxu0 0.0
  %335 = vmatpush1.msra.mxu0 0.0
  %336 = vmatprep.subr.mxu0 0.0
  %337 = vmatpush1.msra.mxu0 0.0
  %338 = vmatprep.subr.mxu0 0.0
  %339 = vmatpush1.msra.mxu0 0.0
  %340 = vmatprep.subr.mxu0 0.0
  %341 = vmatpush1.msra.mxu0 0.0
  %342 = vmatprep.subr.mxu0 0.0
  %343 = vmatpush1.msra.mxu0 0.0
  %344 = vmatprep.subr.mxu0 0.0
  %345 = vmatpush1.msra.mxu0 0.0
  %346 = vmatprep.subr.mxu0 0.0
  %347 = vmatpush1.msra.mxu0 0.0
  %348 = vmatprep.subr.mxu0 0.0
  %349 = vmatpush1.msra.mxu0 0.0
  %350 = vmatprep.mubr.f32.mxu0 0.0
  %351 = vmatmul.mubr.f32.gmra.mrb[0].mxu0 %v91
  %v352 = vpop.f32.mrb[0].mxu0
  %v353 = vadd.f32 %v87, %v352
  %v354 = vpop.f32.mrb[0].mxu0
  %355 = vmatprep.mubr.f32.mxu0 0.0
  %356 = vmatmul.mubr.f32.gmra.mrb[0].mxu0 %v94
  %v357 = vpop.f32.mrb[0].mxu0
  %v358 = vadd.f32 %v87, %v357
  %v359 = vpop.f32.mrb[0].mxu0
  %360 = vmatprep.mubr.f32.mxu0 0.0
  %361 = vmatmul.mubr.f32.gmra.mrb[0].mxu0 %v97
  %v362 = vpop.f32.mrb[0].mxu0
  %v363 = vadd.f32 %v87, %v362
  %v364 = vpop.f32.mrb[0].mxu0
  %365 = vmatprep.mubr.f32.mxu0 0.0
  %366 = vmatmul.mubr.f32.gmra.mrb[0].mxu0 %v100
  %v367 = vpop.f32.mrb[0].mxu0
  %v368 = vadd.f32 %v87, %v367
  %v369 = vpop.f32.mrb[0].mxu0
  %370 = vmatprep.mubr.f32.mxu0 0.0
  %371 = vmatmul.mubr.f32.gmra.mrb[0].mxu0 %v103
  %v372 = vpop.f32.mrb[0].mxu0
  %v373 = vadd.f32 %v87, %v372
  %v374 = vpop.f32.mrb[0].mxu0
  %375 = vmatprep.mubr.f32.mxu0 0.0
  %376 = vmatmul.mubr.f32.gmra.mrb[0].mxu0 %v106
  %v377 = vpop.f32.mrb[0].mxu0
  %v378 = vadd.f32 %v87, %v377
  %v379 = vpop.f32.mrb[0].mxu0
  %380 = vmatprep.mubr.f32.mxu0 0.0
  %381 = vmatmul.mubr.f32.gmra.mrb[0].mxu0 %v109
  %v382 = vpop.f32.mrb[0].mxu0
  %v383 = vadd.f32 %v87, %v382
  %v384 = vpop.f32.mrb[0].mxu0
  %385 = vmatprep.mubr.f32.mxu0 0.0
  %386 = vmatmul.mubr.f32.gmra.mrb[0].mxu0 %v112
  %v387 = vpop.f32.mrb[0].mxu0
  %v388 = vadd.f32 %v87, %v387
  %v389 = vpop.f32.mrb[0].mxu0
  %390 = vmatprep.mubr.f32.mxu0 0.0
  %391 = vmatmul.mubr.f32.gmra.mrb[0].mxu0 %v115
  %v392 = vpop.f32.mrb[0].mxu0
  %v393 = vadd.f32 %v87, %v392
  %v394 = vpop.f32.mrb[0].mxu0
  %395 = vmatprep.mubr.f32.mxu0 0.0
  %396 = vmatmul.mubr.f32.gmra.mrb[0].mxu0 %v118
  %v397 = vpop.f32.mrb[0].mxu0
  %v398 = vadd.f32 %v87, %v397
  %v399 = vpop.f32.mrb[0].mxu0
  %400 = vmatprep.mubr.f32.mxu0 0.0
  %401 = vmatmul.mubr.f32.gmra.mrb[0].mxu0 %v121
  %v402 = vpop.f32.mrb[0].mxu0
  %v403 = vadd.f32 %v87, %v402
  %v404 = vpop.f32.mrb[0].mxu0
  %405 = vmatprep.mubr.f32.mxu0 0.0
  %406 = vmatmul.mubr.f32.gmra.mrb[0].mxu0 %v124
  %v407 = vpop.f32.mrb[0].mxu0
  %v408 = vadd.f32 %v87, %v407
  %v409 = vpop.f32.mrb[0].mxu0
  %410 = vmatprep.mubr.f32.mxu0 0.0
  %411 = vmatmul.mubr.f32.gmra.mrb[0].mxu0 %v127
  %v412 = vpop.f32.mrb[0].mxu0
  %v413 = vadd.f32 %v87, %v412
  %v414 = vpop.f32.mrb[0].mxu0
  %415 = vmatprep.mubr.f32.mxu0 0.0
  %416 = vmatmul.mubr.f32.gmra.mrb[0].mxu0 %v130
  %v417 = vpop.f32.mrb[0].mxu0
  %v418 = vadd.f32 %v87, %v417
  %v419 = vpop.f32.mrb[0].mxu0
  %420 = vmatprep.mubr.f32.mxu0 0.0
  %421 = vmatmul.mubr.f32.gmra.mrb[0].mxu0 %v133
  %v422 = vpop.f32.mrb[0].mxu0
  %v423 = vadd.f32 %v87, %v422
  %v424 = vpop.f32.mrb[0].mxu0
  %425 = vmatprep.mubr.f32.mxu0 0.0
  %426 = vmatmul.mubr.f32.gmra.mrb[0].mxu0 %v136
  %v427 = vpop.f32.mrb[0].mxu0
  %v428 = vadd.f32 %v87, %v427
  %v429 = vpop.f32.mrb[0].mxu0
  %430 = vmatprep.mubr.f32.mxu0 0.0
  %431 = vmatmul.mubr.f32.gmra.mrb[0].mxu0 %v139
  %v432 = vpop.f32.mrb[0].mxu0
  %v433 = vadd.f32 %v87, %v432
  %v434 = vpop.f32.mrb[0].mxu0
  %435 = vmatprep.mubr.f32.mxu0 0.0
  %436 = vmatmul.mubr.f32.gmra.mrb[0].mxu0 %v142
  %v437 = vpop.f32.mrb[0].mxu0
  %v438 = vadd.f32 %v87, %v437
  %v439 = vpop.f32.mrb[0].mxu0
  %440 = vmatprep.mubr.f32.mxu0 0.0
  %441 = vmatmul.mubr.f32.gmra.mrb[0].mxu0 %v145
  %v442 = vpop.f32.mrb[0].mxu0
  %v443 = vadd.f32 %v87, %v442
  %v444 = vpop.f32.mrb[0].mxu0
  %445 = vmatprep.mubr.f32.mxu0 0.0
  %446 = vmatmul.mubr.f32.gmra.mrb[0].mxu0 %v148
  %v447 = vpop.f32.mrb[0].mxu0
  %v448 = vadd.f32 %v87, %v447
  %v449 = vpop.f32.mrb[0].mxu0
  %450 = vmatprep.mubr.f32.mxu0 0.0
  %451 = vmatmul.mubr.f32.gmra.mrb[0].mxu0 %v151
  %v452 = vpop.f32.mrb[0].mxu0
  %v453 = vadd.f32 %v87, %v452
  %v454 = vpop.f32.mrb[0].mxu0
  %455 = vmatprep.mubr.f32.mxu0 0.0
  %456 = vmatmul.mubr.f32.gmra.mrb[0].mxu0 %v154
  %v457 = vpop.f32.mrb[0].mxu0
  %v458 = vadd.f32 %v87, %v457
  %v459 = vpop.f32.mrb[0].mxu0
  %460 = vmatprep.mubr.f32.mxu0 0.0
  %461 = vmatmul.mubr.f32.gmra.mrb[0].mxu0 %v157
  %v462 = vpop.f32.mrb[0].mxu0
  %v463 = vadd.f32 %v87, %v462
  %v464 = vpop.f32.mrb[0].mxu0
  %465 = vmatprep.mubr.f32.mxu0 0.0
  %466 = vmatmul.mubr.f32.gmra.mrb[0].mxu0 %v160
  %v467 = vpop.f32.mrb[0].mxu0
  %v468 = vadd.f32 %v87, %v467
  %v469 = vpop.f32.mrb[0].mxu0
  %470 = vmatprep.mubr.f32.mxu0 0.0
  %471 = vmatmul.mubr.f32.gmra.mrb[0].mxu0 %v163
  %v472 = vpop.f32.mrb[0].mxu0
  %v473 = vadd.f32 %v87, %v472
  %v474 = vpop.f32.mrb[0].mxu0
  %475 = vmatprep.mubr.f32.mxu0 0.0
  %476 = vmatmul.mubr.f32.gmra.mrb[0].mxu0 %v166
  %v477 = vpop.f32.mrb[0].mxu0
  %v478 = vadd.f32 %v87, %v477
  %v479 = vpop.f32.mrb[0].mxu0
  %480 = vmatprep.mubr.f32.mxu0 0.0
  %481 = vmatmul.mubr.f32.gmra.mrb[0].mxu0 %v169
  %v482 = vpop.f32.mrb[0].mxu0
  %v483 = vadd.f32 %v87, %v482
  %v484 = vpop.f32.mrb[0].mxu0
  %485 = vmatprep.mubr.f32.mxu0 0.0
  %486 = vmatmul.mubr.f32.gmra.mrb[0].mxu0 %v172
  %v487 = vpop.f32.mrb[0].mxu0
  %v488 = vadd.f32 %v87, %v487
  %v489 = vpop.f32.mrb[0].mxu0
  %490 = vmatprep.mubr.f32.mxu0 0.0
  %491 = vmatmul.mubr.f32.gmra.mrb[0].mxu0 %v175
  %v492 = vpop.f32.mrb[0].mxu0
  %v493 = vadd.f32 %v87, %v492
  %v494 = vpop.f32.mrb[0].mxu0
  %495 = vmatprep.mubr.f32.mxu0 0.0
  %496 = vmatmul.mubr.f32.gmra.mrb[0].mxu0 %v178
  %v497 = vpop.f32.mrb[0].mxu0
  %v498 = vadd.f32 %v87, %v497
  %v499 = vpop.f32.mrb[0].mxu0
  %500 = vmatprep.mubr.f32.mxu0 0.0
  %501 = vmatmul.mubr.f32.gmra.mrb[0].mxu0 %v181
  %v502 = vpop.f32.mrb[0].mxu0
  %v503 = vadd.f32 %v87, %v502
  %v504 = vpop.f32.mrb[0].mxu0
  %505 = vmatprep.mubr.f32.mxu0 0.0
  %506 = vmatmul.mubr.f32.gmra.mrb[0].mxu0 %v184
  %v507 = vpop.f32.mrb[0].mxu0
  %v508 = vadd.f32 %v87, %v507
  %v509 = vpop.f32.mrb[0].mxu0
  %510 = vmatprep.mubr.f32.mxu0 0.0
  %511 = vmatmul.mubr.f32.gmra.mrb[0].mxu0 %v187
  %v512 = vpop.f32.mrb[0].mxu0
  %v513 = vadd.f32 %v87, %v512
  %v514 = vpop.f32.mrb[0].mxu0
  %515 = vmatprep.mubr.f32.mxu0 0.0
  %516 = vmatmul.mubr.f32.gmra.mrb[0].mxu0 %v190
  %v517 = vpop.f32.mrb[0].mxu0
  %v518 = vadd.f32 %v87, %v517
  %v519 = vpop.f32.mrb[0].mxu0
  %520 = vmatprep.mubr.f32.mxu0 0.0
  %521 = vmatmul.mubr.f32.gmra.mrb[0].mxu0 %v193
  %v522 = vpop.f32.mrb[0].mxu0
  %v523 = vadd.f32 %v87, %v522
  %v524 = vpop.f32.mrb[0].mxu0
  %525 = vmatprep.mubr.f32.mxu0 0.0
  %526 = vmatmul.mubr.f32.gmra.mrb[0].mxu0 %v196
  %v527 = vpop.f32.mrb[0].mxu0
  %v528 = vadd.f32 %v87, %v527
  %v529 = vpop.f32.mrb[0].mxu0
  %530 = vmatprep.mubr.f32.mxu0 0.0
  %531 = vmatmul.mubr.f32.gmra.mrb[0].mxu0 %v199
  %v532 = vpop.f32.mrb[0].mxu0
  %v533 = vadd.f32 %v87, %v532
  %v534 = vpop.f32.mrb[0].mxu0
  %535 = vmatprep.mubr.f32.mxu0 0.0
  %536 = vmatmul.mubr.f32.gmra.mrb[0].mxu0 %v202
  %v537 = vpop.f32.mrb[0].mxu0
  %v538 = vadd.f32 %v87, %v537
  %v539 = vpop.f32.mrb[0].mxu0
  %540 = vmatprep.mubr.f32.mxu0 0.0
  %541 = vmatmul.mubr.f32.gmra.mrb[0].mxu0 %v205
  %v542 = vpop.f32.mrb[0].mxu0
  %v543 = vadd.f32 %v87, %v542
  %v544 = vpop.f32.mrb[0].mxu0
  %545 = vmatprep.mubr.f32.mxu0 0.0
  %546 = vmatmul.mubr.f32.gmra.mrb[0].mxu0 %v208
  %v547 = vpop.f32.mrb[0].mxu0
  %v548 = vadd.f32 %v87, %v547
  %v549 = vpop.f32.mrb[0].mxu0
  %550 = vmatprep.mubr.f32.mxu0 0.0
  %551 = vmatmul.mubr.f32.gmra.mrb[0].mxu0 %v211
  %v552 = vpop.f32.mrb[0].mxu0
  %v553 = vadd.f32 %v87, %v552
  %v554 = vpop.f32.mrb[0].mxu0
  %555 = vmatprep.mubr.f32.mxu0 0.0
  %556 = vmatmul.mubr.f32.gmra.mrb[0].mxu0 %v214
  %v557 = vpop.f32.mrb[0].mxu0
  %v558 = vadd.f32 %v87, %v557
  %v559 = vpop.f32.mrb[0].mxu0
  %560 = vmatprep.mubr.f32.mxu0 0.0
  %561 = vmatmul.mubr.f32.gmra.mrb[0].mxu0 %v217
  %v562 = vpop.f32.mrb[0].mxu0
  %v563 = vadd.f32 %v87, %v562
  %v564 = vpop.f32.mrb[0].mxu0
  %565 = vmatprep.mubr.f32.mxu0 0.0
  %566 = vmatmul.mubr.f32.gmra.mrb[0].mxu0 %v220
  %v567 = vpop.f32.mrb[0].mxu0
  %v568 = vadd.f32 %v87, %v567
  %v569 = vpop.f32.mrb[0].mxu0
  %570 = vmatprep.mubr.f32.mxu0 0.0
  %571 = vmatmul.mubr.f32.gmra.mrb[0].mxu0 %v223
  %v572 = vpop.f32.mrb[0].mxu0
  %v573 = vadd.f32 %v87, %v572
  %v574 = vpop.f32.mrb[0].mxu0
  %575 = vmatprep.mubr.f32.mxu0 0.0
  %576 = vmatmul.mubr.f32.gmra.mrb[0].mxu0 %v226
  %v577 = vpop.f32.mrb[0].mxu0
  %v578 = vadd.f32 %v87, %v577
  %v579 = vpop.f32.mrb[0].mxu0
  %580 = vmatprep.mubr.f32.mxu0 0.0
  %581 = vmatmul.mubr.f32.gmra.mrb[0].mxu0 %v229
  %v582 = vpop.f32.mrb[0].mxu0
  %v583 = vadd.f32 %v87, %v582
  %v584 = vpop.f32.mrb[0].mxu0
  %585 = vmatprep.mubr.f32.mxu0 0.0
  %586 = vmatmul.mubr.f32.gmra.mrb[0].mxu0 %v232
  %v587 = vpop.f32.mrb[0].mxu0
  %v588 = vadd.f32 %v87, %v587
  %v589 = vpop.f32.mrb[0].mxu0
  %590 = vmatprep.mubr.f32.mxu0 0.0
  %591 = vmatmul.mubr.f32.gmra.mrb[0].mxu0 %v235
  %v592 = vpop.f32.mrb[0].mxu0
  %v593 = vadd.f32 %v87, %v592
  %v594 = vpop.f32.mrb[0].mxu0
  %595 = vmatprep.mubr.f32.mxu0 0.0
  %596 = vmatmul.mubr.f32.gmra.mrb[0].mxu0 %v238
  %v597 = vpop.f32.mrb[0].mxu0
  %v598 = vadd.f32 %v87, %v597
  %v599 = vpop.f32.mrb[0].mxu0
  %600 = vmatprep.mubr.f32.mxu0 0.0
  %601 = vmatmul.mubr.f32.gmra.mrb[0].mxu0 %v241
  %v602 = vpop.f32.mrb[0].mxu0
  %v603 = vadd.f32 %v87, %v602
  %v604 = vpop.f32.mrb[0].mxu0
  %605 = vmatprep.mubr.f32.mxu0 0.0
  %606 = vmatmul.mubr.f32.gmra.mrb[0].mxu0 %v244
  %v607 = vpop.f32.mrb[0].mxu0
  %v608 = vadd.f32 %v87, %v607
  %v609 = vpop.f32.mrb[0].mxu0
  %610 = vmatprep.mubr.f32.mxu0 0.0
  %611 = vmatmul.mubr.f32.gmra.mrb[0].mxu0 %v247
  %v612 = vpop.f32.mrb[0].mxu0
  %v613 = vadd.f32 %v87, %v612
  %v614 = vpop.f32.mrb[0].mxu0
  %615 = vmatprep.mubr.f32.mxu0 0.0
  %616 = vmatmul.mubr.f32.gmra.mrb[0].mxu0 %v250
  %v617 = vpop.f32.mrb[0].mxu0
  %v618 = vadd.f32 %v87, %v617
  %v619 = vpop.f32.mrb[0].mxu0
  %620 = vmatprep.mubr.f32.mxu0 0.0
  %621 = vmatmul.mubr.f32.gmra.mrb[0].mxu0 %v253
  %v622 = vpop.f32.mrb[0].mxu0
  %v623 = vadd.f32 %v87, %v622
  %v624 = vpop.f32.mrb[0].mxu0
  %625 = vmatprep.mubr.f32.mxu0 0.0
  %626 = vmatmul.mubr.f32.gmra.mrb[0].mxu0 %v256
  %v627 = vpop.f32.mrb[0].mxu0
  %v628 = vadd.f32 %v87, %v627
  %v629 = vpop.f32.mrb[0].mxu0
  %630 = vmatprep.mubr.f32.mxu0 0.0
  %631 = vmatmul.mubr.f32.gmra.mrb[0].mxu0 %v259
  %v632 = vpop.f32.mrb[0].mxu0
  %v633 = vadd.f32 %v87, %v632
  %v634 = vpop.f32.mrb[0].mxu0
  %635 = vmatprep.mubr.f32.mxu0 0.0
  %636 = vmatmul.mubr.f32.gmra.mrb[0].mxu0 %v262
  %v637 = vpop.f32.mrb[0].mxu0
  %v638 = vadd.f32 %v87, %v637
  %v639 = vpop.f32.mrb[0].mxu0
  %640 = vmatprep.mubr.f32.mxu0 0.0
  %641 = vmatmul.mubr.f32.gmra.mrb[0].mxu0 %v265
  %v642 = vpop.f32.mrb[0].mxu0
  %v643 = vadd.f32 %v87, %v642
  %v644 = vpop.f32.mrb[0].mxu0
  %645 = vmatprep.mubr.f32.mxu0 0.0
  %646 = vmatmul.mubr.f32.gmra.mrb[0].mxu0 %v268
  %v647 = vpop.f32.mrb[0].mxu0
  %v648 = vadd.f32 %v87, %v647
  %v649 = vpop.f32.mrb[0].mxu0
  %650 = vmatprep.mubr.f32.mxu0 0.0
  %651 = vmatmul.mubr.f32.gmra.mrb[0].mxu0 %v271
  %v652 = vpop.f32.mrb[0].mxu0
  %v653 = vadd.f32 %v87, %v652
  %v654 = vpop.f32.mrb[0].mxu0
  %655 = vmatprep.mubr.f32.mxu0 0.0
  %656 = vmatmul.mubr.f32.gmra.mrb[0].mxu0 %v274
  %v657 = vpop.f32.mrb[0].mxu0
  %v658 = vadd.f32 %v87, %v657
  %v659 = vpop.f32.mrb[0].mxu0
  %660 = vmatprep.mubr.f32.mxu0 0.0
  %661 = vmatmul.mubr.f32.gmra.mrb[0].mxu0 %v277
  %v662 = vpop.f32.mrb[0].mxu0
  %v663 = vadd.f32 %v87, %v662
  %v664 = vpop.f32.mrb[0].mxu0
  %665 = vmatprep.mubr.f32.mxu0 0.0
  %666 = vmatmul.mubr.f32.gmra.mrb[0].mxu0 %v280
  %v667 = vpop.f32.mrb[0].mxu0
  %v668 = vadd.f32 %v87, %v667
  %v669 = vpop.f32.mrb[0].mxu0
  %670 = vdwg.mxu0
  %v671 = vld [vmem:[%s2] sm:$0xf]
  %v673 = vsel %vm282, %v671, 0
  %675 = vmatprep.subr.mxu0 0.0
  %676 = vmatpush1.msra.mxu0 %v673
  %677 = vmatprep.subr.mxu0 0.0
  %678 = vmatpush1.msra.mxu0 0.0
  %679 = vmatprep.subr.mxu0 0.0
  %680 = vmatpush1.msra.mxu0 0.0
  %681 = vmatprep.subr.mxu0 0.0
  %682 = vmatpush1.msra.mxu0 0.0
  %683 = vmatprep.subr.mxu0 0.0
  %684 = vmatpush1.msra.mxu0 0.0
  %685 = vmatprep.subr.mxu0 0.0
  %686 = vmatpush1.msra.mxu0 0.0
  %687 = vmatprep.subr.mxu0 0.0
  %688 = vmatpush1.msra.mxu0 0.0
  %689 = vmatprep.subr.mxu0 0.0
  %690 = vmatpush1.msra.mxu0 0.0
  %691 = vmatprep.subr.mxu0 0.0
  %692 = vmatpush1.msra.mxu0 0.0
  %693 = vmatprep.subr.mxu0 0.0
  %694 = vmatpush1.msra.mxu0 0.0
  %695 = vmatprep.subr.mxu0 0.0
  %696 = vmatpush1.msra.mxu0 0.0
  %697 = vmatprep.subr.mxu0 0.0
  %698 = vmatpush1.msra.mxu0 0.0
  %699 = vmatprep.subr.mxu0 0.0
  %700 = vmatpush1.msra.mxu0 0.0
  %701 = vmatprep.subr.mxu0 0.0
  %702 = vmatpush1.msra.mxu0 0.0
  %703 = vmatprep.subr.mxu0 0.0
  %704 = vmatpush1.msra.mxu0 0.0
  %705 = vmatprep.subr.mxu0 0.0
  %706 = vmatpush1.msra.mxu0 0.0
  %707 = vmatprep.subr.mxu0 0.0
  %708 = vmatpush1.msra.mxu0 0.0
  %709 = vmatprep.subr.mxu0 0.0
  %710 = vmatpush1.msra.mxu0 0.0
  %711 = vmatprep.subr.mxu0 0.0
  %712 = vmatpush1.msra.mxu0 0.0
  %713 = vmatprep.subr.mxu0 0.0
  %714 = vmatpush1.msra.mxu0 0.0
  %715 = vmatprep.subr.mxu0 0.0
  %716 = vmatpush1.msra.mxu0 0.0
  %717 = vmatprep.subr.mxu0 0.0
  %718 = vmatpush1.msra.mxu0 0.0
  %719 = vmatprep.subr.mxu0 0.0
  %720 = vmatpush1.msra.mxu0 0.0
  %721 = vmatprep.subr.mxu0 0.0
  %722 = vmatpush1.msra.mxu0 0.0
  %723 = vmatprep.subr.mxu0 0.0
  %724 = vmatpush1.msra.mxu0 0.0
  %725 = vmatprep.subr.mxu0 0.0
  %726 = vmatpush1.msra.mxu0 0.0
  %727 = vmatprep.subr.mxu0 0.0
  %728 = vmatpush1.msra.mxu0 0.0
  %729 = vmatprep.subr.mxu0 0.0
  %730 = vmatpush1.msra.mxu0 0.0
  %731 = vmatprep.subr.mxu0 0.0
  %732 = vmatpush1.msra.mxu0 0.0
  %733 = vmatprep.subr.mxu0 0.0
  %734 = vmatpush1.msra.mxu0 0.0
  %735 = vmatprep.subr.mxu0 0.0
  %736 = vmatpush1.msra.mxu0 0.0
  %737 = vmatprep.subr.mxu0 0.0
  %738 = vmatpush1.msra.mxu0 0.0
  %739 = vmatprep.mubr.f32.mxu0 0.0
  %740 = vmatmul.mubr.f32.gmra.mrb[0].mxu0 %v91
  %v741 = vpop.f32.mrb[0].mxu0
  %v742 = vadd.f32 %v87, %v741
  %v743 = vpop.f32.mrb[0].mxu0
  %744 = vmatprep.mubr.f32.mxu0 0.0
  %745 = vmatmul.mubr.f32.gmra.mrb[0].mxu0 %v94
  %v746 = vpop.f32.mrb[0].mxu0
  %v747 = vadd.f32 %v87, %v746
  %v748 = vpop.f32.mrb[0].mxu0
  %749 = vmatprep.mubr.f32.mxu0 0.0
  %750 = vmatmul.mubr.f32.gmra.mrb[0].mxu0 %v97
  %v751 = vpop.f32.mrb[0].mxu0
  %v752 = vadd.f32 %v87, %v751
  %v753 = vpop.f32.mrb[0].mxu0
  %754 = vmatprep.mubr.f32.mxu0 0.0
  %755 = vmatmul.mubr.f32.gmra.mrb[0].mxu0 %v100
  %v756 = vpop.f32.mrb[0].mxu0
  %v757 = vadd.f32 %v87, %v756
  %v758 = vpop.f32.mrb[0].mxu0
  %759 = vmatprep.mubr.f32.mxu0 0.0
  %760 = vmatmul.mubr.f32.gmra.mrb[0].mxu0 %v103
  %v761 = vpop.f32.mrb[0].mxu0
  %v762 = vadd.f32 %v87, %v761
  %v763 = vpop.f32.mrb[0].mxu0
  %764 = vmatprep.mubr.f32.mxu0 0.0
  %765 = vmatmul.mubr.f32.gmra.mrb[0].mxu0 %v106
  %v766 = vpop.f32.mrb[0].mxu0
  %v767 = vadd.f32 %v87, %v766
  %v768 = vpop.f32.mrb[0].mxu0
  %769 = vmatprep.mubr.f32.mxu0 0.0
  %770 = vmatmul.mubr.f32.gmra.mrb[0].mxu0 %v109
  %v771 = vpop.f32.mrb[0].mxu0
  %v772 = vadd.f32 %v87, %v771
  %v773 = vpop.f32.mrb[0].mxu0
  %774 = vmatprep.mubr.f32.mxu0 0.0
  %775 = vmatmul.mubr.f32.gmra.mrb[0].mxu0 %v112
  %v776 = vpop.f32.mrb[0].mxu0
  %v777 = vadd.f32 %v87, %v776
  %v778 = vpop.f32.mrb[0].mxu0
  %779 = vmatprep.mubr.f32.mxu0 0.0
  %780 = vmatmul.mubr.f32.gmra.mrb[0].mxu0 %v115
  %v781 = vpop.f32.mrb[0].mxu0
  %v782 = vadd.f32 %v87, %v781
  %v783 = vpop.f32.mrb[0].mxu0
  %784 = vmatprep.mubr.f32.mxu0 0.0
  %785 = vmatmul.mubr.f32.gmra.mrb[0].mxu0 %v118
  %v786 = vpop.f32.mrb[0].mxu0
  %v787 = vadd.f32 %v87, %v786
  %v788 = vpop.f32.mrb[0].mxu0
  %789 = vmatprep.mubr.f32.mxu0 0.0
  %790 = vmatmul.mubr.f32.gmra.mrb[0].mxu0 %v121
  %v791 = vpop.f32.mrb[0].mxu0
  %v792 = vadd.f32 %v87, %v791
  %v793 = vpop.f32.mrb[0].mxu0
  %794 = vmatprep.mubr.f32.mxu0 0.0
  %795 = vmatmul.mubr.f32.gmra.mrb[0].mxu0 %v124
  %v796 = vpop.f32.mrb[0].mxu0
  %v797 = vadd.f32 %v87, %v796
  %v798 = vpop.f32.mrb[0].mxu0
  %799 = vmatprep.mubr.f32.mxu0 0.0
  %800 = vmatmul.mubr.f32.gmra.mrb[0].mxu0 %v127
  %v801 = vpop.f32.mrb[0].mxu0
  %v802 = vadd.f32 %v87, %v801
  %v803 = vpop.f32.mrb[0].mxu0
  %804 = vmatprep.mubr.f32.mxu0 0.0
  %805 = vmatmul.mubr.f32.gmra.mrb[0].mxu0 %v130
  %v806 = vpop.f32.mrb[0].mxu0
  %v807 = vadd.f32 %v87, %v806
  %v808 = vpop.f32.mrb[0].mxu0
  %809 = vmatprep.mubr.f32.mxu0 0.0
  %810 = vmatmul.mubr.f32.gmra.mrb[0].mxu0 %v133
  %v811 = vpop.f32.mrb[0].mxu0
  %v812 = vadd.f32 %v87, %v811
  %v813 = vpop.f32.mrb[0].mxu0
  %814 = vmatprep.mubr.f32.mxu0 0.0
  %815 = vmatmul.mubr.f32.gmra.mrb[0].mxu0 %v136
  %v816 = vpop.f32.mrb[0].mxu0
  %v817 = vadd.f32 %v87, %v816
  %v818 = vpop.f32.mrb[0].mxu0
  %819 = vmatprep.mubr.f32.mxu0 0.0
  %820 = vmatmul.mubr.f32.gmra.mrb[0].mxu0 %v139
  %v821 = vpop.f32.mrb[0].mxu0
  %v822 = vadd.f32 %v87, %v821
  %v823 = vpop.f32.mrb[0].mxu0
  %824 = vmatprep.mubr.f32.mxu0 0.0
  %825 = vmatmul.mubr.f32.gmra.mrb[0].mxu0 %v142
  %v826 = vpop.f32.mrb[0].mxu0
  %v827 = vadd.f32 %v87, %v826
  %v828 = vpop.f32.mrb[0].mxu0
  %829 = vmatprep.mubr.f32.mxu0 0.0
  %830 = vmatmul.mubr.f32.gmra.mrb[0].mxu0 %v145
  %v831 = vpop.f32.mrb[0].mxu0
  %v832 = vadd.f32 %v87, %v831
  %v833 = vpop.f32.mrb[0].mxu0
  %834 = vmatprep.mubr.f32.mxu0 0.0
  %835 = vmatmul.mubr.f32.gmra.mrb[0].mxu0 %v148
  %v836 = vpop.f32.mrb[0].mxu0
  %v837 = vadd.f32 %v87, %v836
  %v838 = vpop.f32.mrb[0].mxu0
  %839 = vmatprep.mubr.f32.mxu0 0.0
  %840 = vmatmul.mubr.f32.gmra.mrb[0].mxu0 %v151
  %v841 = vpop.f32.mrb[0].mxu0
  %v842 = vadd.f32 %v87, %v841
  %v843 = vpop.f32.mrb[0].mxu0
  %844 = vmatprep.mubr.f32.mxu0 0.0
  %845 = vmatmul.mubr.f32.gmra.mrb[0].mxu0 %v154
  %v846 = vpop.f32.mrb[0].mxu0
  %v847 = vadd.f32 %v87, %v846
  %v848 = vpop.f32.mrb[0].mxu0
  %849 = vmatprep.mubr.f32.mxu0 0.0
  %850 = vmatmul.mubr.f32.gmra.mrb[0].mxu0 %v157
  %v851 = vpop.f32.mrb[0].mxu0
  %v852 = vadd.f32 %v87, %v851
  %v853 = vpop.f32.mrb[0].mxu0
  %854 = vmatprep.mubr.f32.mxu0 0.0
  %855 = vmatmul.mubr.f32.gmra.mrb[0].mxu0 %v160
  %v856 = vpop.f32.mrb[0].mxu0
  %v857 = vadd.f32 %v87, %v856
  %v858 = vpop.f32.mrb[0].mxu0
  %859 = vmatprep.mubr.f32.mxu0 0.0
  %860 = vmatmul.mubr.f32.gmra.mrb[0].mxu0 %v163
  %v861 = vpop.f32.mrb[0].mxu0
  %v862 = vadd.f32 %v87, %v861
  %v863 = vpop.f32.mrb[0].mxu0
  %864 = vmatprep.mubr.f32.mxu0 0.0
  %865 = vmatmul.mubr.f32.gmra.mrb[0].mxu0 %v166
  %v866 = vpop.f32.mrb[0].mxu0
  %v867 = vadd.f32 %v87, %v866
  %v868 = vpop.f32.mrb[0].mxu0
  %869 = vmatprep.mubr.f32.mxu0 0.0
  %870 = vmatmul.mubr.f32.gmra.mrb[0].mxu0 %v169
  %v871 = vpop.f32.mrb[0].mxu0
  %v872 = vadd.f32 %v87, %v871
  %v873 = vpop.f32.mrb[0].mxu0
  %874 = vmatprep.mubr.f32.mxu0 0.0
  %875 = vmatmul.mubr.f32.gmra.mrb[0].mxu0 %v172
  %v876 = vpop.f32.mrb[0].mxu0
  %v877 = vadd.f32 %v87, %v876
  %v878 = vpop.f32.mrb[0].mxu0
  %879 = vmatprep.mubr.f32.mxu0 0.0
  %880 = vmatmul.mubr.f32.gmra.mrb[0].mxu0 %v175
  %v881 = vpop.f32.mrb[0].mxu0
  %v882 = vadd.f32 %v87, %v881
  %v883 = vpop.f32.mrb[0].mxu0
  %884 = vmatprep.mubr.f32.mxu0 0.0
  %885 = vmatmul.mubr.f32.gmra.mrb[0].mxu0 %v178
  %v886 = vpop.f32.mrb[0].mxu0
  %v887 = vadd.f32 %v87, %v886
  %v888 = vpop.f32.mrb[0].mxu0
  %889 = vmatprep.mubr.f32.mxu0 0.0
  %890 = vmatmul.mubr.f32.gmra.mrb[0].mxu0 %v181
  %v891 = vpop.f32.mrb[0].mxu0
  %v892 = vadd.f32 %v87, %v891
  %v893 = vpop.f32.mrb[0].mxu0
  %894 = vmatprep.mubr.f32.mxu0 0.0
  %895 = vmatmul.mubr.f32.gmra.mrb[0].mxu0 %v184
  %v896 = vpop.f32.mrb[0].mxu0
  %v897 = vadd.f32 %v87, %v896
  %v898 = vpop.f32.mrb[0].mxu0
  %899 = vmatprep.mubr.f32.mxu0 0.0
  %900 = vmatmul.mubr.f32.gmra.mrb[0].mxu0 %v187
  %v901 = vpop.f32.mrb[0].mxu0
  %v902 = vadd.f32 %v87, %v901
  %v903 = vpop.f32.mrb[0].mxu0
  %904 = vmatprep.mubr.f32.mxu0 0.0
  %905 = vmatmul.mubr.f32.gmra.mrb[0].mxu0 %v190
  %v906 = vpop.f32.mrb[0].mxu0
  %v907 = vadd.f32 %v87, %v906
  %v908 = vpop.f32.mrb[0].mxu0
  %909 = vmatprep.mubr.f32.mxu0 0.0
  %910 = vmatmul.mubr.f32.gmra.mrb[0].mxu0 %v193
  %v911 = vpop.f32.mrb[0].mxu0
  %v912 = vadd.f32 %v87, %v911
  %v913 = vpop.f32.mrb[0].mxu0
  %914 = vmatprep.mubr.f32.mxu0 0.0
  %915 = vmatmul.mubr.f32.gmra.mrb[0].mxu0 %v196
  %v916 = vpop.f32.mrb[0].mxu0
  %v917 = vadd.f32 %v87, %v916
  %v918 = vpop.f32.mrb[0].mxu0
  %919 = vmatprep.mubr.f32.mxu0 0.0
  %920 = vmatmul.mubr.f32.gmra.mrb[0].mxu0 %v199
  %v921 = vpop.f32.mrb[0].mxu0
  %v922 = vadd.f32 %v87, %v921
  %v923 = vpop.f32.mrb[0].mxu0
  %924 = vmatprep.mubr.f32.mxu0 0.0
  %925 = vmatmul.mubr.f32.gmra.mrb[0].mxu0 %v202
  %v926 = vpop.f32.mrb[0].mxu0
  %v927 = vadd.f32 %v87, %v926
  %v928 = vpop.f32.mrb[0].mxu0
  %929 = vmatprep.mubr.f32.mxu0 0.0
  %930 = vmatmul.mubr.f32.gmra.mrb[0].mxu0 %v205
  %v931 = vpop.f32.mrb[0].mxu0
  %v932 = vadd.f32 %v87, %v931
  %v933 = vpop.f32.mrb[0].mxu0
  %934 = vmatprep.mubr.f32.mxu0 0.0
  %935 = vmatmul.mubr.f32.gmra.mrb[0].mxu0 %v208
  %v936 = vpop.f32.mrb[0].mxu0
  %v937 = vadd.f32 %v87, %v936
  %v938 = vpop.f32.mrb[0].mxu0
  %939 = vmatprep.mubr.f32.mxu0 0.0
  %940 = vmatmul.mubr.f32.gmra.mrb[0].mxu0 %v211
  %v941 = vpop.f32.mrb[0].mxu0
  %v942 = vadd.f32 %v87, %v941
  %v943 = vpop.f32.mrb[0].mxu0
  %944 = vmatprep.mubr.f32.mxu0 0.0
  %945 = vmatmul.mubr.f32.gmra.mrb[0].mxu0 %v214
  %v946 = vpop.f32.mrb[0].mxu0
  %v947 = vadd.f32 %v87, %v946
  %v948 = vpop.f32.mrb[0].mxu0
  %949 = vmatprep.mubr.f32.mxu0 0.0
  %950 = vmatmul.mubr.f32.gmra.mrb[0].mxu0 %v217
  %v951 = vpop.f32.mrb[0].mxu0
  %v952 = vadd.f32 %v87, %v951
  %v953 = vpop.f32.mrb[0].mxu0
  %954 = vmatprep.mubr.f32.mxu0 0.0
  %955 = vmatmul.mubr.f32.gmra.mrb[0].mxu0 %v220
  %v956 = vpop.f32.mrb[0].mxu0
  %v957 = vadd.f32 %v87, %v956
  %v958 = vpop.f32.mrb[0].mxu0
  %959 = vmatprep.mubr.f32.mxu0 0.0
  %960 = vmatmul.mubr.f32.gmra.mrb[0].mxu0 %v223
  %v961 = vpop.f32.mrb[0].mxu0
  %v962 = vadd.f32 %v87, %v961
  %v963 = vpop.f32.mrb[0].mxu0
  %964 = vmatprep.mubr.f32.mxu0 0.0
  %965 = vmatmul.mubr.f32.gmra.mrb[0].mxu0 %v226
  %v966 = vpop.f32.mrb[0].mxu0
  %v967 = vadd.f32 %v87, %v966
  %v968 = vpop.f32.mrb[0].mxu0
  %969 = vmatprep.mubr.f32.mxu0 0.0
  %970 = vmatmul.mubr.f32.gmra.mrb[0].mxu0 %v229
  %v971 = vpop.f32.mrb[0].mxu0
  %v972 = vadd.f32 %v87, %v971
  %v973 = vpop.f32.mrb[0].mxu0
  %974 = vmatprep.mubr.f32.mxu0 0.0
  %975 = vmatmul.mubr.f32.gmra.mrb[0].mxu0 %v232
  %v976 = vpop.f32.mrb[0].mxu0
  %v977 = vadd.f32 %v87, %v976
  %v978 = vpop.f32.mrb[0].mxu0
  %979 = vmatprep.mubr.f32.mxu0 0.0
  %980 = vmatmul.mubr.f32.gmra.mrb[0].mxu0 %v235
  %v981 = vpop.f32.mrb[0].mxu0
  %v982 = vadd.f32 %v87, %v981
  %v983 = vpop.f32.mrb[0].mxu0
  %984 = vmatprep.mubr.f32.mxu0 0.0
  %985 = vmatmul.mubr.f32.gmra.mrb[0].mxu0 %v238
  %v986 = vpop.f32.mrb[0].mxu0
  %v987 = vadd.f32 %v87, %v986
  %v988 = vpop.f32.mrb[0].mxu0
  %989 = vmatprep.mubr.f32.mxu0 0.0
  %990 = vmatmul.mubr.f32.gmra.mrb[0].mxu0 %v241
  %v991 = vpop.f32.mrb[0].mxu0
  %v992 = vadd.f32 %v87, %v991
  %v993 = vpop.f32.mrb[0].mxu0
  %994 = vmatprep.mubr.f32.mxu0 0.0
  %995 = vmatmul.mubr.f32.gmra.mrb[0].mxu0 %v244
  %v996 = vpop.f32.mrb[0].mxu0
  %v997 = vadd.f32 %v87, %v996
  %v998 = vpop.f32.mrb[0].mxu0
  %999 = vmatprep.mubr.f32.mxu0 0.0
  %1000 = vmatmul.mubr.f32.gmra.mrb[0].mxu0 %v247
  %v1001 = vpop.f32.mrb[0].mxu0
  %v1002 = vadd.f32 %v87, %v1001
  %v1003 = vpop.f32.mrb[0].mxu0
  %1004 = vmatprep.mubr.f32.mxu0 0.0
  %1005 = vmatmul.mubr.f32.gmra.mrb[0].mxu0 %v250
  %v1006 = vpop.f32.mrb[0].mxu0
  %v1007 = vadd.f32 %v87, %v1006
  %v1008 = vpop.f32.mrb[0].mxu0
  %1009 = vmatprep.mubr.f32.mxu0 0.0
  %1010 = vmatmul.mubr.f32.gmra.mrb[0].mxu0 %v253
  %v1011 = vpop.f32.mrb[0].mxu0
  %v1012 = vadd.f32 %v87, %v1011
  %v1013 = vpop.f32.mrb[0].mxu0
  %1014 = vmatprep.mubr.f32.mxu0 0.0
  %1015 = vmatmul.mubr.f32.gmra.mrb[0].mxu0 %v256
  %v1016 = vpop.f32.mrb[0].mxu0
  %v1017 = vadd.f32 %v87, %v1016
  %v1018 = vpop.f32.mrb[0].mxu0
  %1019 = vmatprep.mubr.f32.mxu0 0.0
  %1020 = vmatmul.mubr.f32.gmra.mrb[0].mxu0 %v259
  %v1021 = vpop.f32.mrb[0].mxu0
  %v1022 = vadd.f32 %v87, %v1021
  %v1023 = vpop.f32.mrb[0].mxu0
  %1024 = vmatprep.mubr.f32.mxu0 0.0
  %1025 = vmatmul.mubr.f32.gmra.mrb[0].mxu0 %v262
  %v1026 = vpop.f32.mrb[0].mxu0
  %v1027 = vadd.f32 %v87, %v1026
  %v1028 = vpop.f32.mrb[0].mxu0
  %1029 = vmatprep.mubr.f32.mxu0 0.0
  %1030 = vmatmul.mubr.f32.gmra.mrb[0].mxu0 %v265
  %v1031 = vpop.f32.mrb[0].mxu0
  %v1032 = vadd.f32 %v87, %v1031
  %v1033 = vpop.f32.mrb[0].mxu0
  %1034 = vmatprep.mubr.f32.mxu0 0.0
  %1035 = vmatmul.mubr.f32.gmra.mrb[0].mxu0 %v268
  %v1036 = vpop.f32.mrb[0].mxu0
  %v1037 = vadd.f32 %v87, %v1036
  %v1038 = vpop.f32.mrb[0].mxu0
  %1039 = vmatprep.mubr.f32.mxu0 0.0
  %1040 = vmatmul.mubr.f32.gmra.mrb[0].mxu0 %v271
  %v1041 = vpop.f32.mrb[0].mxu0
  %v1042 = vadd.f32 %v87, %v1041
  %v1043 = vpop.f32.mrb[0].mxu0
  %1044 = vmatprep.mubr.f32.mxu0 0.0
  %1045 = vmatmul.mubr.f32.gmra.mrb[0].mxu0 %v274
  %v1046 = vpop.f32.mrb[0].mxu0
  %v1047 = vadd.f32 %v87, %v1046
  %v1048 = vpop.f32.mrb[0].mxu0
  %1049 = vmatprep.mubr.f32.mxu0 0.0
  %1050 = vmatmul.mubr.f32.gmra.mrb[0].mxu0 %v277
  %v1051 = vpop.f32.mrb[0].mxu0
  %v1052 = vadd.f32 %v87, %v1051
  %v1053 = vpop.f32.mrb[0].mxu0
  %1054 = vmatprep.mubr.f32.mxu0 0.0
  %1055 = vmatmul.mubr.f32.gmra.mrb[0].mxu0 %v280
  %v1056 = vpop.f32.mrb[0].mxu0
  %v1057 = vadd.f32 %v87, %v1056
  %v1058 = vpop.f32.mrb[0].mxu0
  %1059 = vdwg.mxu0
  %vm1060 = vcmask 130048
  %1061 = vst.msk [vmem:[%s4] sm:$0xff] %vm1060, %v353
  %1062 = vst.msk [vmem:[%s4 + $0x8] sm:$0xff] %vm1060, %v358
  %1063 = vst.msk [vmem:[%s4 + $0x20] sm:$0xff] %vm1060, %v363
  %1064 = vst.msk [vmem:[%s4 + $0x28] sm:$0xff] %vm1060, %v368
  %1065 = vst.msk [vmem:[%s4 + $0x40] sm:$0xff] %vm1060, %v373
  %1066 = vst.msk [vmem:[%s4 + $0x48] sm:$0xff] %vm1060, %v378
  %1067 = vst.msk [vmem:[%s4 + $0x60] sm:$0xff] %vm1060, %v383
  %1068 = vst.msk [vmem:[%s4 + $0x68] sm:$0xff] %vm1060, %v388
  %1069 = vst.msk [vmem:[%s4 + $0x80] sm:$0xff] %vm1060, %v393
  %1070 = vst.msk [vmem:[%s4 + $0x88] sm:$0xff] %vm1060, %v398
  %1071 = vst.msk [vmem:[%s4 + $0xa0] sm:$0xff] %vm1060, %v403
  %1072 = vst.msk [vmem:[%s4 + $0xa8] sm:$0xff] %vm1060, %v408
  %1073 = vst.msk [vmem:[%s4 + $0xc0] sm:$0xff] %vm1060, %v413
  %1074 = vst.msk [vmem:[%s4 + $0xc8] sm:$0xff] %vm1060, %v418
  %1075 = vst.msk [vmem:[%s4 + $0xe0] sm:$0xff] %vm1060, %v423
  %1076 = vst.msk [vmem:[%s4 + $0xe8] sm:$0xff] %vm1060, %v428
  %1077 = vst.msk [vmem:[%s4 + $0x100] sm:$0xff] %vm1060, %v433
  %1078 = vst.msk [vmem:[%s4 + $0x108] sm:$0xff] %vm1060, %v438
  %1079 = vst.msk [vmem:[%s4 + $0x120] sm:$0xff] %vm1060, %v443
  %1080 = vst.msk [vmem:[%s4 + $0x128] sm:$0xff] %vm1060, %v448
  %1081 = vst.msk [vmem:[%s4 + $0x140] sm:$0xff] %vm1060, %v453
  %1082 = vst.msk [vmem:[%s4 + $0x148] sm:$0xff] %vm1060, %v458
  %1083 = vst.msk [vmem:[%s4 + $0x160] sm:$0xff] %vm1060, %v463
  %1084 = vst.msk [vmem:[%s4 + $0x168] sm:$0xff] %vm1060, %v468
  %1085 = vst.msk [vmem:[%s4 + $0x180] sm:$0xff] %vm1060, %v473
  %1086 = vst.msk [vmem:[%s4 + $0x188] sm:$0xff] %vm1060, %v478
  %1087 = vst.msk [vmem:[%s4 + $0x1a0] sm:$0xff] %vm1060, %v483
  %1088 = vst.msk [vmem:[%s4 + $0x1a8] sm:$0xff] %vm1060, %v488
  %1089 = vst.msk [vmem:[%s4 + $0x1c0] sm:$0xff] %vm1060, %v493
  %1090 = vst.msk [vmem:[%s4 + $0x1c8] sm:$0xff] %vm1060, %v498
  %1091 = vst.msk [vmem:[%s4 + $0x1e0] sm:$0xff] %vm1060, %v503
  %1092 = vst.msk [vmem:[%s4 + $0x1e8] sm:$0xff] %vm1060, %v508
  %1093 = vst.msk [vmem:[%s4 + $0x200] sm:$0xff] %vm1060, %v513
  %1094 = vst.msk [vmem:[%s4 + $0x208] sm:$0xff] %vm1060, %v518
  %1095 = vst.msk [vmem:[%s4 + $0x220] sm:$0xff] %vm1060, %v523
  %1096 = vst.msk [vmem:[%s4 + $0x228] sm:$0xff] %vm1060, %v528
  %1097 = vst.msk [vmem:[%s4 + $0x240] sm:$0xff] %vm1060, %v533
  %1098 = vst.msk [vmem:[%s4 + $0x248] sm:$0xff] %vm1060, %v538
  %1099 = vst.msk [vmem:[%s4 + $0x260] sm:$0xff] %vm1060, %v543
  %1100 = vst.msk [vmem:[%s4 + $0x268] sm:$0xff] %vm1060, %v548
  %1101 = vst.msk [vmem:[%s4 + $0x280] sm:$0xff] %vm1060, %v553
  %1102 = vst.msk [vmem:[%s4 + $0x288] sm:$0xff] %vm1060, %v558
  %1103 = vst.msk [vmem:[%s4 + $0x2a0] sm:$0xff] %vm1060, %v563
  %1104 = vst.msk [vmem:[%s4 + $0x2a8] sm:$0xff] %vm1060, %v568
  %1105 = vst.msk [vmem:[%s4 + $0x2c0] sm:$0xff] %vm1060, %v573
  %1106 = vst.msk [vmem:[%s4 + $0x2c8] sm:$0xff] %vm1060, %v578
  %1107 = vst.msk [vmem:[%s4 + $0x2e0] sm:$0xff] %vm1060, %v583
  %1108 = vst.msk [vmem:[%s4 + $0x2e8] sm:$0xff] %vm1060, %v588
  %1109 = vst.msk [vmem:[%s4 + $0x300] sm:$0xff] %vm1060, %v593
  %1110 = vst.msk [vmem:[%s4 + $0x308] sm:$0xff] %vm1060, %v598
  %1111 = vst.msk [vmem:[%s4 + $0x320] sm:$0xff] %vm1060, %v603
  %1112 = vst.msk [vmem:[%s4 + $0x328] sm:$0xff] %vm1060, %v608
  %1113 = vst.msk [vmem:[%s4 + $0x340] sm:$0xff] %vm1060, %v613
  %1114 = vst.msk [vmem:[%s4 + $0x348] sm:$0xff] %vm1060, %v618
  %1115 = vst.msk [vmem:[%s4 + $0x360] sm:$0xff] %vm1060, %v623
  %1116 = vst.msk [vmem:[%s4 + $0x368] sm:$0xff] %vm1060, %v628
  %1117 = vst.msk [vmem:[%s4 + $0x380] sm:$0xff] %vm1060, %v633
  %1118 = vst.msk [vmem:[%s4 + $0x388] sm:$0xff] %vm1060, %v638
  %1119 = vst.msk [vmem:[%s4 + $0x3a0] sm:$0xff] %vm1060, %v643
  %1120 = vst.msk [vmem:[%s4 + $0x3a8] sm:$0xff] %vm1060, %v648
  %1121 = vst.msk [vmem:[%s4 + $0x3c0] sm:$0xff] %vm1060, %v653
  %1122 = vst.msk [vmem:[%s4 + $0x3c8] sm:$0xff] %vm1060, %v658
  %1123 = vst.msk [vmem:[%s4 + $0x3e0] sm:$0xff] %vm1060, %v663
  %1124 = vst.msk [vmem:[%s4 + $0x3e8] sm:$0xff] %vm1060, %v668
  %s1125 = scalar_lea.vmem %s4, 16
  %1126 = vst.msk [vmem:[%s1125] sm:$0xff] %vm1060, %v742
  %1127 = vst.msk [vmem:[%s1125 + $0x8] sm:$0xff] %vm1060, %v747
  %1128 = vst.msk [vmem:[%s1125 + $0x20] sm:$0xff] %vm1060, %v752
  %1129 = vst.msk [vmem:[%s1125 + $0x28] sm:$0xff] %vm1060, %v757
  %1130 = vst.msk [vmem:[%s1125 + $0x40] sm:$0xff] %vm1060, %v762
  %1131 = vst.msk [vmem:[%s1125 + $0x48] sm:$0xff] %vm1060, %v767
  %1132 = vst.msk [vmem:[%s1125 + $0x60] sm:$0xff] %vm1060, %v772
  %1133 = vst.msk [vmem:[%s1125 + $0x68] sm:$0xff] %vm1060, %v777
  %1134 = vst.msk [vmem:[%s1125 + $0x80] sm:$0xff] %vm1060, %v782
  %1135 = vst.msk [vmem:[%s1125 + $0x88] sm:$0xff] %vm1060, %v787
  %1136 = vst.msk [vmem:[%s1125 + $0xa0] sm:$0xff] %vm1060, %v792
  %1137 = vst.msk [vmem:[%s1125 + $0xa8] sm:$0xff] %vm1060, %v797
  %1138 = vst.msk [vmem:[%s1125 + $0xc0] sm:$0xff] %vm1060, %v802
  %1139 = vst.msk [vmem:[%s1125 + $0xc8] sm:$0xff] %vm1060, %v807
  %1140 = vst.msk [vmem:[%s1125 + $0xe0] sm:$0xff] %vm1060, %v812
  %1141 = vst.msk [vmem:[%s1125 + $0xe8] sm:$0xff] %vm1060, %v817
  %1142 = vst.msk [vmem:[%s1125 + $0x100] sm:$0xff] %vm1060, %v822
  %1143 = vst.msk [vmem:[%s1125 + $0x108] sm:$0xff] %vm1060, %v827
  %1144 = vst.msk [vmem:[%s1125 + $0x120] sm:$0xff] %vm1060, %v832
  %1145 = vst.msk [vmem:[%s1125 + $0x128] sm:$0xff] %vm1060, %v837
  %1146 = vst.msk [vmem:[%s1125 + $0x140] sm:$0xff] %vm1060, %v842
  %1147 = vst.msk [vmem:[%s1125 + $0x148] sm:$0xff] %vm1060, %v847
  %1148 = vst.msk [vmem:[%s1125 + $0x160] sm:$0xff] %vm1060, %v852
  %1149 = vst.msk [vmem:[%s1125 + $0x168] sm:$0xff] %vm1060, %v857
  %1150 = vst.msk [vmem:[%s1125 + $0x180] sm:$0xff] %vm1060, %v862
  %1151 = vst.msk [vmem:[%s1125 + $0x188] sm:$0xff] %vm1060, %v867
  %1152 = vst.msk [vmem:[%s1125 + $0x1a0] sm:$0xff] %vm1060, %v872
  %1153 = vst.msk [vmem:[%s1125 + $0x1a8] sm:$0xff] %vm1060, %v877
  %1154 = vst.msk [vmem:[%s1125 + $0x1c0] sm:$0xff] %vm1060, %v882
  %1155 = vst.msk [vmem:[%s1125 + $0x1c8] sm:$0xff] %vm1060, %v887
  %1156 = vst.msk [vmem:[%s1125 + $0x1e0] sm:$0xff] %vm1060, %v892
  %1157 = vst.msk [vmem:[%s1125 + $0x1e8] sm:$0xff] %vm1060, %v897
  %1158 = vst.msk [vmem:[%s1125 + $0x200] sm:$0xff] %vm1060, %v902
  %1159 = vst.msk [vmem:[%s1125 + $0x208] sm:$0xff] %vm1060, %v907
  %1160 = vst.msk [vmem:[%s1125 + $0x220] sm:$0xff] %vm1060, %v912
  %1161 = vst.msk [vmem:[%s1125 + $0x228] sm:$0xff] %vm1060, %v917
  %1162 = vst.msk [vmem:[%s1125 + $0x240] sm:$0xff] %vm1060, %v922
  %1163 = vst.msk [vmem:[%s1125 + $0x248] sm:$0xff] %vm1060, %v927
  %1164 = vst.msk [vmem:[%s1125 + $0x260] sm:$0xff] %vm1060, %v932
  %1165 = vst.msk [vmem:[%s1125 + $0x268] sm:$0xff] %vm1060, %v937
  %1166 = vst.msk [vmem:[%s1125 + $0x280] sm:$0xff] %vm1060, %v942
  %1167 = vst.msk [vmem:[%s1125 + $0x288] sm:$0xff] %vm1060, %v947
  %1168 = vst.msk [vmem:[%s1125 + $0x2a0] sm:$0xff] %vm1060, %v952
  %1169 = vst.msk [vmem:[%s1125 + $0x2a8] sm:$0xff] %vm1060, %v957
  %1170 = vst.msk [vmem:[%s1125 + $0x2c0] sm:$0xff] %vm1060, %v962
  %1171 = vst.msk [vmem:[%s1125 + $0x2c8] sm:$0xff] %vm1060, %v967
  %1172 = vst.msk [vmem:[%s1125 + $0x2e0] sm:$0xff] %vm1060, %v972
  %1173 = vst.msk [vmem:[%s1125 + $0x2e8] sm:$0xff] %vm1060, %v977
  %1174 = vst.msk [vmem:[%s1125 + $0x300] sm:$0xff] %vm1060, %v982
  %1175 = vst.msk [vmem:[%s1125 + $0x308] sm:$0xff] %vm1060, %v987
  %1176 = vst.msk [vmem:[%s1125 + $0x320] sm:$0xff] %vm1060, %v992
  %1177 = vst.msk [vmem:[%s1125 + $0x328] sm:$0xff] %vm1060, %v997
  %1178 = vst.msk [vmem:[%s1125 + $0x340] sm:$0xff] %vm1060, %v1002
  %1179 = vst.msk [vmem:[%s1125 + $0x348] sm:$0xff] %vm1060, %v1007
  %1180 = vst.msk [vmem:[%s1125 + $0x360] sm:$0xff] %vm1060, %v1012
  %1181 = vst.msk [vmem:[%s1125 + $0x368] sm:$0xff] %vm1060, %v1017
  %1182 = vst.msk [vmem:[%s1125 + $0x380] sm:$0xff] %vm1060, %v1022
  %1183 = vst.msk [vmem:[%s1125 + $0x388] sm:$0xff] %vm1060, %v1027
  %1184 = vst.msk [vmem:[%s1125 + $0x3a0] sm:$0xff] %vm1060, %v1032
  %1185 = vst.msk [vmem:[%s1125 + $0x3a8] sm:$0xff] %vm1060, %v1037
  %1186 = vst.msk [vmem:[%s1125 + $0x3c0] sm:$0xff] %vm1060, %v1042
  %1187 = vst.msk [vmem:[%s1125 + $0x3c8] sm:$0xff] %vm1060, %v1047
  %1188 = vst.msk [vmem:[%s1125 + $0x3e0] sm:$0xff] %vm1060, %v1052
  %1189 = vst.msk [vmem:[%s1125 + $0x3e8] sm:$0xff] %vm1060, %v1057
  // Predicated region
  $region18: #{tpu_custom_call.1} parent=0 // pred_check
    _
  $region19: #{tpu_custom_call.1} parent=0 // pred_check_branch
    %1191 = sbr.rel (0) target = $region21
  $region20: #{tpu_custom_call.1} parent=0 // pred_region
    _
  $region21: #{tpu_custom_call.1} parent=0 // pred_fallthru
    _
  // Predicated region
  $region22: #{tpu_custom_call.1} parent=0 // pred_check
    _
  $region23: #{tpu_custom_call.1} parent=0 // pred_check_branch
    %1193 = sbr.rel (0) target = $region25
  $region24: #{tpu_custom_call.1} parent=0 // pred_region
    _
  $region25: #{tpu_custom_call.1} parent=0 // pred_fallthru
    _

</llo_original>
